<compile_context>
chip_gen: v7x
topology: tpu7x:2x2x1
jax: 0.10.0
libtpu: 0.0.40
codegen_flags: <defaults>
</compile_context>

<pallas_src>
import functools

import jax
import jax.numpy as jnp
from jax import lax
from jax.experimental import pallas as pl
from jax.experimental.pallas import tpu as pltpu


_LN_EPS = 1e-5


# ----------------------------- Helpers ------------------------------------ #

def _round_up(a, b):
    return ((a + b - 1) // b) * b


def _choose_row_tile(n_rows, d, dtype, *, vmem_budget_bytes=24 * 1024 * 1024):
    """Largest row tile (multiple of the sublane packing) whose double-buffered
    working set stays well under a conservative VMEM budget (fits v7x 64 MiB
    physical / 32 MiB scoped as well as v5e/v6e)."""
    itemsize = jnp.dtype(dtype).itemsize
    sublane = 16 if itemsize == 2 else 8          # bf16 packs 2 rows / sublane
    # Per tile-row bytes resident in VMEM: double-buffered {x, rand bits, out}
    # plus f32 intermediates inside the kernel body.
    bytes_per_row = d * (2 * (itemsize + 4 + itemsize) + 4 * 4)
    tile = vmem_budget_bytes // max(bytes_per_row, 1)
    tile = max(sublane, (tile // sublane) * sublane)
    tile = min(tile, 2048)                        # diminishing returns beyond
    tile = min(tile, _round_up(n_rows, sublane))  # don't exceed (padded) data
    return tile


def _compiler_params():
    return pltpu.CompilerParams(
        dimension_semantics=("parallel",),
        vmem_limit_bytes=48 * 1024 * 1024,
    )


def _dropout_threshold(p):
    # keep = (u32 bits >= threshold)  =>  P(keep) = 1 - p  (to 2^-32 resolution)
    return min(int(round(float(p) * 2.0 ** 32)), 2 ** 32 - 1)


# ----------------------------- Kernels ------------------------------------ #

def _fused_sublayer_kernel(x_ref, g_ref, b_ref, w_ref, bias_ref, *rest,
                           eps, keep_thresh, inv_keep_p, use_dropout):
    """out = x + dropout(LayerNorm(x) @ w + bias) for one row tile."""
    if use_dropout:
        r_ref, o_ref = rest
    else:
        (o_ref,) = rest

    x = x_ref[...].astype(jnp.float32)                       # (tm, D)
    mean = jnp.mean(x, axis=-1, keepdims=True)
    cx = x - mean
    var = jnp.mean(cx * cx, axis=-1, keepdims=True)
    normed = cx * lax.rsqrt(var + eps) * g_ref[...] + b_ref[...]

    # Linear sublayer on the MXU, f32 accumulation.
    y = jnp.dot(normed.astype(w_ref.dtype), w_ref[...],
                preferred_element_type=jnp.float32) + bias_ref[...]

    if use_dropout:
        keep = r_ref[...] >= jnp.uint32(keep_thresh)          # integer compare
        y = jnp.where(keep, y * inv_keep_p, 0.0)

    o_ref[...] = (x + y).astype(o_ref.dtype)


def _layernorm_kernel(x_ref, g_ref, b_ref, o_ref, *, eps):
    x = x_ref[...].astype(jnp.float32)                        # (tm, D)
    mean = jnp.mean(x, axis=-1, keepdims=True)
    cx = x - mean
    var = jnp.mean(cx * cx, axis=-1, keepdims=True)
    y = cx * lax.rsqrt(var + eps) * g_ref[...] + b_ref[...]
    o_ref[...] = y.astype(o_ref.dtype)


def _residual_dropout_kernel(x_ref, y_ref, *rest,
                             keep_thresh, inv_keep_p, use_dropout):
    if use_dropout:
        r_ref, o_ref = rest
    else:
        (o_ref,) = rest
    x = x_ref[...].astype(jnp.float32)
    y = y_ref[...].astype(jnp.float32)
    if use_dropout:
        keep = r_ref[...] >= jnp.uint32(keep_thresh)
        y = jnp.where(keep, y * inv_keep_p, 0.0)
    o_ref[...] = (x + y).astype(o_ref.dtype)


# ----------------------------- Wrappers ------------------------------------ #

def fused_sublayer_connection(x, gamma, beta, w, bias, *, dropout_p, rng_key,
                              training=True, eps=_LN_EPS, tile=None):
    """Fast path: out = x + dropout(LayerNorm(x) @ w + bias), one pallas_call."""
    B, S, D = x.shape
    R = B * S
    x2d = x.reshape(R, D)
    if tile is None:
        tile = _choose_row_tile(R, D, x.dtype)
    R_pad = _round_up(R, tile)
    if R_pad != R:
        x2d = jnp.pad(x2d, ((0, R_pad - R), (0, 0)))

    use_dropout = bool(training) and float(dropout_p) > 0.0
    keep_thresh = _dropout_threshold(dropout_p) if use_dropout else 0
    inv_keep_p = 1.0 / (1.0 - float(dropout_p)) if use_dropout else 1.0

    args = [x2d,
            gamma.reshape(1, D).astype(jnp.float32),
            beta.reshape(1, D).astype(jnp.float32),
            w,
            bias.reshape(1, D).astype(jnp.float32)]
    in_specs = [
        pl.BlockSpec((tile, D), lambda i: (i, 0)),
        pl.BlockSpec((1, D), lambda i: (0, 0)),
        pl.BlockSpec((1, D), lambda i: (0, 0)),
        pl.BlockSpec((D, D), lambda i: (0, 0)),   # whole weight resident; for
        # very large D this would become a K-loop with an f32 VMEM accumulator.
        pl.BlockSpec((1, D), lambda i: (0, 0)),
    ]
    if use_dropout:
        # Random bits drawn outside the kernel: runs identically on real TPUs
        # and under the Pallas interpreter (in-kernel pltpu.prng_* has no
        # interpreter lowering).
        rbits = jax.random.bits(rng_key, (R_pad, D), dtype=jnp.uint32)
        args.append(rbits)
        in_specs.append(pl.BlockSpec((tile, D), lambda i: (i, 0)))

    kernel = functools.partial(
        _fused_sublayer_kernel, eps=float(eps), keep_thresh=keep_thresh,
        inv_keep_p=inv_keep_p, use_dropout=use_dropout)

    out = pl.pallas_call(
        kernel,
        out_shape=jax.ShapeDtypeStruct((R_pad, D), x.dtype),
        grid=(R_pad // tile,),
        in_specs=in_specs,
        out_specs=pl.BlockSpec((tile, D), lambda i: (i, 0)),
        compiler_params=_compiler_params(),
    )(*args)
    return out[:R].reshape(B, S, D)


def layer_norm_pallas(x2d, gamma, beta, *, eps=_LN_EPS, tile=None):
    R, D = x2d.shape
    if tile is None:
        tile = _choose_row_tile(R, D, x2d.dtype)
    R_pad = _round_up(R, tile)
    xp = jnp.pad(x2d, ((0, R_pad - R), (0, 0))) if R_pad != R else x2d
    out = pl.pallas_call(
        functools.partial(_layernorm_kernel, eps=float(eps)),
        out_shape=jax.ShapeDtypeStruct((R_pad, D), x2d.dtype),
        grid=(R_pad // tile,),
        in_specs=[pl.BlockSpec((tile, D), lambda i: (i, 0)),
                  pl.BlockSpec((1, D), lambda i: (0, 0)),
                  pl.BlockSpec((1, D), lambda i: (0, 0))],
        out_specs=pl.BlockSpec((tile, D), lambda i: (i, 0)),
        compiler_params=_compiler_params(),
    )(xp,
      gamma.reshape(1, D).astype(jnp.float32),
      beta.reshape(1, D).astype(jnp.float32))
    return out[:R]


def residual_dropout_pallas(x2d, y2d, *, dropout_p, rng_key, training=True,
                            tile=None):
    R, D = x2d.shape
    if tile is None:
        tile = _choose_row_tile(R, D, x2d.dtype)
    R_pad = _round_up(R, tile)
    if R_pad != R:
        x2d = jnp.pad(x2d, ((0, R_pad - R), (0, 0)))
        y2d = jnp.pad(y2d, ((0, R_pad - R), (0, 0)))

    use_dropout = bool(training) and float(dropout_p) > 0.0
    keep_thresh = _dropout_threshold(dropout_p) if use_dropout else 0
    inv_keep_p = 1.0 / (1.0 - float(dropout_p)) if use_dropout else 1.0

    args = [x2d, y2d]
    in_specs = [pl.BlockSpec((tile, D), lambda i: (i, 0)),
                pl.BlockSpec((tile, D), lambda i: (i, 0))]
    if use_dropout:
        rbits = jax.random.bits(rng_key, (R_pad, D), dtype=jnp.uint32)
        args.append(rbits)
        in_specs.append(pl.BlockSpec((tile, D), lambda i: (i, 0)))

    kernel = functools.partial(
        _residual_dropout_kernel, keep_thresh=keep_thresh,
        inv_keep_p=inv_keep_p, use_dropout=use_dropout)

    out = pl.pallas_call(
        kernel,
        out_shape=jax.ShapeDtypeStruct((R_pad, D), x2d.dtype),
        grid=(R_pad // tile,),
        in_specs=in_specs,
        out_specs=pl.BlockSpec((tile, D), lambda i: (i, 0)),
        compiler_params=_compiler_params(),
    )(*args)
    return out[:R]


def sublayer_connection(x, sublayer_fn, gamma, beta, *, dropout_p, rng_key,
                        training=True, eps=_LN_EPS, tile=None):
    """General path: out = x + dropout(sublayer_fn(LayerNorm(x))), with
    `sublayer_fn` an arbitrary JAX callable (as in the PyTorch module)."""
    B, S, D = x.shape
    x2d = x.reshape(B * S, D)
    normed = layer_norm_pallas(x2d, gamma, beta, eps=eps, tile=tile)
    sub = sublayer_fn(normed.reshape(B, S, D)).reshape(B * S, D)
    out2d = residual_dropout_pallas(x2d, sub, dropout_p=dropout_p,
                                    rng_key=rng_key, training=training,
                                    tile=tile)
    return out2d.reshape(B, S, D)


# ------------------------------- Main -------------------------------------- #

if __name__ == "__main__":
    B, S, D = 2, 8, 32
    dropout_p = 0.1

    key = jax.random.PRNGKey(0)
    kx, kw, kb, kdrop = jax.random.split(key, 4)

    x = jax.random.normal(kx, (B, S, D), dtype=jnp.float32)

    # LayerNorm affine params (PyTorch init: gamma=1, beta=0).
    gamma = jnp.ones((D,), dtype=jnp.float32)
    beta = jnp.zeros((D,), dtype=jnp.float32)

    # Example sublayer: linear projection D -> D.
    w = jax.random.normal(kw, (D, D), dtype=jnp.float32) * (1.0 / jnp.sqrt(D))
    b = jax.random.normal(kb, (D,), dtype=jnp.float32) * 0.01

    # 1) Fused fast path, eval mode: compare with a pure-JAX reference.
    out_eval = fused_sublayer_connection(x, gamma, beta, w, b,
                                         dropout_p=dropout_p, rng_key=kdrop,
                                         training=False)
    jax.block_until_ready(out_eval)

    mu = jnp.mean(x, axis=-1, keepdims=True)
    var = jnp.mean((x - mu) ** 2, axis=-1, keepdims=True)
    normed_ref = (x - mu) / jnp.sqrt(var + _LN_EPS) * gamma + beta
    ref = x + (jnp.dot(normed_ref, w) + b)
    assert out_eval.shape == (B, S, D) and out_eval.dtype == x.dtype
    assert jnp.allclose(out_eval, ref, rtol=1e-2, atol=1e-2)

    # 2) Fused fast path, training mode (dropout active).
    out_train = fused_sublayer_connection(x, gamma, beta, w, b,
                                          dropout_p=dropout_p, rng_key=kdrop,
                                          training=True)
    jax.block_until_ready(out_train)
    assert out_train.shape == (B, S, D)
    assert bool(jnp.all(jnp.isfinite(out_train)))

    # 3) Fallback path with an arbitrary (non-linear) sublayer callable.
    sublayer_fn = lambda h: jax.nn.gelu(jnp.dot(h, w) + b)
    out_gen = sublayer_connection(x, sublayer_fn, gamma, beta,
                                  dropout_p=dropout_p, rng_key=kdrop,
                                  training=True)
    jax.block_until_ready(out_gen)
    assert out_gen.shape == (B, S, D)

    print("KERNEL_OK")
</pallas_src>

<mosaic_0001>
module attributes {stable_mosaic.version = 11 : i64} {
  func.func @_fused_sublayer_kernel(%arg0: i32, %arg1: memref<16x32xf32, #tpu.memory_space<vmem>>, %arg2: memref<1x32xf32, #tpu.memory_space<vmem>>, %arg3: memref<1x32xf32, #tpu.memory_space<vmem>>, %arg4: memref<32x32xf32, #tpu.memory_space<vmem>>, %arg5: memref<1x32xf32, #tpu.memory_space<vmem>>, %arg6: memref<16x32xf32, #tpu.memory_space<vmem>>) attributes {dimension_semantics = [#tpu.dimension_semantics<parallel>], iteration_bounds = array<i64: 1>, scalar_prefetch = 0 : i64, scratch_operands = 0 : i64, tpu.core_type = #tpu.core_type<tc>, window_params = [{transform_indices = @transform_0, window_bounds = array<i64: 16, 32>}, {pipeline_mode = #tpu.pipeline_mode<synchronous>, transform_indices = @transform_1, window_bounds = array<i64: 1, 32>}, {pipeline_mode = #tpu.pipeline_mode<synchronous>, transform_indices = @transform_2, window_bounds = array<i64: 1, 32>}, {pipeline_mode = #tpu.pipeline_mode<synchronous>, transform_indices = @transform_3, window_bounds = array<i64: 32, 32>}, {pipeline_mode = #tpu.pipeline_mode<synchronous>, transform_indices = @transform_4, window_bounds = array<i64: 1, 32>}, {transform_indices = @transform_5, window_bounds = array<i64: 16, 32>}]} {
    %c0 = arith.constant 0 : index
    %c0_0 = arith.constant 0 : index
    %0 = vector.load %arg1[%c0, %c0_0] : memref<16x32xf32, #tpu.memory_space<vmem>>, vector<16x32xf32>
    %cst = arith.constant dense<0.000000e+00> : vector<16xf32>
    %1 = vector.multi_reduction <add>, %0, %cst [1] : vector<16x32xf32> to vector<16xf32>
    %2 = vector.shape_cast %1 : vector<16xf32> to vector<16x1xf32>
    %cst_1 = arith.constant 3.200000e+01 : f32
    %3 = vector.broadcast %cst_1 : f32 to vector<16x1xf32>
    %4 = arith.divf %2, %3 : vector<16x1xf32>
    %5 = vector.broadcast %4 : vector<16x1xf32> to vector<16x32xf32>
    %6 = arith.subf %0, %5 : vector<16x32xf32>
    %7 = arith.mulf %6, %6 : vector<16x32xf32>
    %cst_2 = arith.constant dense<0.000000e+00> : vector<16xf32>
    %8 = vector.multi_reduction <add>, %7, %cst_2 [1] : vector<16x32xf32> to vector<16xf32>
    %9 = vector.shape_cast %8 : vector<16xf32> to vector<16x1xf32>
    %cst_3 = arith.constant 3.200000e+01 : f32
    %10 = vector.broadcast %cst_3 : f32 to vector<16x1xf32>
    %11 = arith.divf %9, %10 : vector<16x1xf32>
    %cst_4 = arith.constant 9.99999974E-6 : f32
    %12 = vector.broadcast %cst_4 : f32 to vector<16x1xf32>
    %13 = arith.addf %11, %12 : vector<16x1xf32>
    %14 = math.rsqrt %13 : vector<16x1xf32>
    %15 = vector.broadcast %14 : vector<16x1xf32> to vector<16x32xf32>
    %16 = arith.mulf %6, %15 : vector<16x32xf32>
    %c0_5 = arith.constant 0 : index
    %c0_6 = arith.constant 0 : index
    %17 = vector.load %arg2[%c0_5, %c0_6] : memref<1x32xf32, #tpu.memory_space<vmem>>, vector<1x32xf32>
    %18 = vector.broadcast %17 : vector<1x32xf32> to vector<16x32xf32>
    %19 = arith.mulf %16, %18 : vector<16x32xf32>
    %c0_7 = arith.constant 0 : index
    %c0_8 = arith.constant 0 : index
    %20 = vector.load %arg3[%c0_7, %c0_8] : memref<1x32xf32, #tpu.memory_space<vmem>>, vector<1x32xf32>
    %21 = vector.broadcast %20 : vector<1x32xf32> to vector<16x32xf32>
    %22 = arith.addf %19, %21 : vector<16x32xf32>
    %c0_9 = arith.constant 0 : index
    %c0_10 = arith.constant 0 : index
    %23 = vector.load %arg4[%c0_9, %c0_10] : memref<32x32xf32, #tpu.memory_space<vmem>>, vector<32x32xf32>
    %cst_11 = arith.constant dense<0.000000e+00> : vector<16x32xf32>
    %24 = tpu.matmul %22, %23, %cst_11 {dimension_numbers = #tpu.dot_dimension_numbers<[1], [0], [0], [1], [0, 0, 1, 1], [], []>} : vector<16x32xf32>, vector<32x32xf32>, vector<16x32xf32> -> vector<16x32xf32>
    %c0_12 = arith.constant 0 : index
    %c0_13 = arith.constant 0 : index
    %25 = vector.load %arg5[%c0_12, %c0_13] : memref<1x32xf32, #tpu.memory_space<vmem>>, vector<1x32xf32>
    %26 = vector.broadcast %25 : vector<1x32xf32> to vector<16x32xf32>
    %27 = arith.addf %24, %26 : vector<16x32xf32>
    %28 = arith.addf %0, %27 : vector<16x32xf32>
    %c0_14 = arith.constant 0 : index
    %c0_15 = arith.constant 0 : index
    %29 = vector.load %arg6[%c0_14, %c0_15] : memref<16x32xf32, #tpu.memory_space<vmem>>, vector<16x32xf32>
    tpu.vector_store %arg6[%c0_14, %c0_15], %28 {strides = array<i32>} : memref<16x32xf32, #tpu.memory_space<vmem>>, vector<16x32xf32>,
    return
  }
  func.func @transform_0(%arg0: i32) -> (i32, i32) {
    %c0_i32 = arith.constant 0 : i32
    %c0_i32_0 = arith.constant 0 : i32
    return %arg0, %c0_i32 : i32, i32
  }
  func.func @transform_1(%arg0: i32) -> (i32, i32) {
    %c0_i32 = arith.constant 0 : i32
    %c0_i32_0 = arith.constant 0 : i32
    %c0_i32_1 = arith.constant 0 : i32
    return %c0_i32, %c0_i32_0 : i32, i32
  }
  func.func @transform_2(%arg0: i32) -> (i32, i32) {
    %c0_i32 = arith.constant 0 : i32
    %c0_i32_0 = arith.constant 0 : i32
    %c0_i32_1 = arith.constant 0 : i32
    return %c0_i32, %c0_i32_0 : i32, i32
  }
  func.func @transform_3(%arg0: i32) -> (i32, i32) {
    %c0_i32 = arith.constant 0 : i32
    %c0_i32_0 = arith.constant 0 : i32
    %c0_i32_1 = arith.constant 0 : i32
    return %c0_i32, %c0_i32_0 : i32, i32
  }
  func.func @transform_4(%arg0: i32) -> (i32, i32) {
    %c0_i32 = arith.constant 0 : i32
    %c0_i32_0 = arith.constant 0 : i32
    %c0_i32_1 = arith.constant 0 : i32
    return %c0_i32, %c0_i32_0 : i32, i32
  }
  func.func @transform_5(%arg0: i32) -> (i32, i32) {
    %c0_i32 = arith.constant 0 : i32
    %c0_i32_0 = arith.constant 0 : i32
    return %arg0, %c0_i32 : i32, i32
  }
}

</mosaic_0001>

<llo_original>
// kernel: tpu_custom_call.1
$region0: #{tpu_custom_call.1}
  #allocation0 [shape = 'u32[]', space=smem, size = 0x4, offset = 0x4, fixed_abs, tag = 'smem constant byte address 0x4 - core index']
  #allocation1 [shape = 'u32[144,128]{1,0:T(1,128)}', space=vmem, size = 0x12000, scoped, tag = 'internal scratch']
  %s0 = inlined_call_operand.hbm [shape: f32[16,32], index: 0, kind: input, shape index: {}]
  %s1 = inlined_call_operand.vmem [shape: f32[1,32], index: 1, kind: input, shape index: {}]
  %s2 = inlined_call_operand.vmem [shape: f32[1,32], index: 2, kind: input, shape index: {}]
  %s3 = inlined_call_operand.hbm [shape: f32[32,32], index: 3, kind: input, shape index: {}]
  %s4 = inlined_call_operand.vmem [shape: f32[1,32], index: 4, kind: input, shape index: {}]
  %s5 = inlined_call_operand.hbm [shape: f32[16,32], index: 5, kind: output, shape index: {}]
  %s6 = sld [smem:[#allocation0]]
  $region38: #{tpu_custom_call.1} parent=0
    _
  %s8 = ssub.s32 1, %s6
  %s9 = scalar_select 0, %s8, %s6
  $region1: #{tpu_custom_call.1} parent=0
    #allocation2 [shape = 'u8[8192]{0}', space=vmem, size = 0x2000, scoped, tag = 'input window, operand 0, single buffered']
    #allocation3 [shape = 's32[1]{0}', space=sflag, size = 0x4, scoped, tag = 'scoped memory for tpu_custom_call.1']
    #allocation4 [shape = 's32[1]{0}', space=sflag, size = 0x4, scoped, tag = 'scoped memory for tpu_custom_call.1']
    #allocation5 [shape = 'u8[16384]{0}', space=vmem, size = 0x4000, scoped, tag = 'input window, operand 3, single buffered']
    #allocation6 [shape = 's32[1]{0}', space=sflag, size = 0x4, scoped, tag = 'scoped memory for tpu_custom_call.1']
    #allocation7 [shape = 'u8[8192]{0}', space=vmem, size = 0x2000, scoped, tag = 'output window, operand 0, single buffered']
    %10 = vsyncpa [#allocation3], 0
    %11 = vsyncpa [#allocation6], 0
    %12 = vsyncpa [#allocation4], 0
    // Predicated region
    $region2: #{tpu_custom_call.1} parent=1 // pred_check
      _
    $region3: #{tpu_custom_call.1} parent=1 // pred_check_branch
      %14 = sbr.rel (0) target = $region5
    $region4: #{tpu_custom_call.1} parent=1 // pred_region
      %s16 = ssub.s32 256, 256
      %17 = vsyncadd [#allocation3], %s16
      %s18 = sshll.u32 [#allocation2], 4
      %s19 = int_to_ptr.vmem [resolvable:$true] %s18
      %24 = dma.hbm_to_vmem [thread:$0]  %s0, 256, %s19, [#allocation3], 128, 128, 8
    $region5: #{tpu_custom_call.1} parent=1 // pred_fallthru
      _
    // Predicated region
    $region6: #{tpu_custom_call.1} parent=1 // pred_check
      _
    $region7: #{tpu_custom_call.1} parent=1 // pred_check_branch
      %26 = sbr.rel (0) target = $region9
    $region8: #{tpu_custom_call.1} parent=1 // pred_region
      _
    $region9: #{tpu_custom_call.1} parent=1 // pred_fallthru
      _
    // Predicated region
    $region10: #{tpu_custom_call.1} parent=1 // pred_check
      _
    $region11: #{tpu_custom_call.1} parent=1 // pred_check_branch
      %28 = sbr.rel (0) target = $region13
    $region12: #{tpu_custom_call.1} parent=1 // pred_region
      _
    $region13: #{tpu_custom_call.1} parent=1 // pred_fallthru
      _
    // Predicated region
    $region14: #{tpu_custom_call.1} parent=1 // pred_check
      _
    $region15: #{tpu_custom_call.1} parent=1 // pred_check_branch
      %30 = sbr.rel (0) target = $region17
    $region16: #{tpu_custom_call.1} parent=1 // pred_region
      %s32 = ssub.s32 512, 512
      %33 = vsyncadd [#allocation6], %s32
      %s34 = sshll.u32 [#allocation5], 4
      %s35 = int_to_ptr.vmem [resolvable:$true] %s34
      %40 = dma.hbm_to_vmem [thread:$0]  %s3, 512, %s35, [#allocation6], 128, 128, 8
    $region17: #{tpu_custom_call.1} parent=1 // pred_fallthru
      _
    // Predicated region
    $region18: #{tpu_custom_call.1} parent=1 // pred_check
      _
    $region19: #{tpu_custom_call.1} parent=1 // pred_check_branch
      %42 = sbr.rel (0) target = $region21
    $region20: #{tpu_custom_call.1} parent=1 // pred_region
      _
    $region21: #{tpu_custom_call.1} parent=1 // pred_fallthru
      _
    // Predicated region
    $region22: #{tpu_custom_call.1} parent=1 // pred_check
      _
    $region23: #{tpu_custom_call.1} parent=1 // pred_check_branch
      %44 = sbr.rel (0) target = $region25
    $region24: #{tpu_custom_call.1} parent=1 // pred_region
      %45 = dma.done [#allocation3], 256
    $region25: #{tpu_custom_call.1} parent=1 // pred_fallthru
      _
    // Predicated region
    $region26: #{tpu_custom_call.1} parent=1 // pred_check
      _
    $region27: #{tpu_custom_call.1} parent=1 // pred_check_branch
      %47 = sbr.rel (0) target = $region29
    $region28: #{tpu_custom_call.1} parent=1 // pred_region
      %48 = dma.done [#allocation6], 512
    $region29: #{tpu_custom_call.1} parent=1 // pred_fallthru
      _
    %v49 = vld [vmem:[#allocation2] sm:$0xff]
    %v50 = vld [vmem:[#allocation2 + $0x8] sm:$0xff]
    %vm51 = vcmask 261120
    %v52 = vsel %vm51, %v49, 0.0
    %53 = vadd.xlane.f32.xlu0 %v52
    %v54 = vpop.xlane.xlu0 %53
    %v55 = vsel %vm51, %v50, 0.0
    %56 = vadd.xlane.f32.xlu0 %v55
    %v57 = vpop.xlane.xlu0 %56
    %v58 = vrcp.pop 32.0
    %v59 = vmul.f32 %v54, %v58
    %v60 = vmul.f32 %v57, %v58
    %v61 = vsub.f32 %v49, %v59
    %v62 = vsub.f32 %v50, %v60
    %v63 = vmul.f32 %v61, %v61
    %v64 = vmul.f32 %v62, %v62
    %v65 = vsel %vm51, %v63, 0.0
    %66 = vadd.xlane.f32.xlu0 %v65
    %v67 = vpop.xlane.xlu0 %66
    %v68 = vsel %vm51, %v64, 0.0
    %69 = vadd.xlane.f32.xlu0 %v68
    %v70 = vpop.xlane.xlu0 %69
    %v71 = vmul.f32 %v67, %v58
    %v72 = vmul.f32 %v70, %v58
    %v73 = vadd.f32 %v71, 1e-05
    %v74 = vadd.f32 %v72, 1e-05
    %v75 = vrsqrt.pop %v73
    %v76 = vrsqrt.pop %v74
    %v77 = vmul.f32 %v61, %v75
    %v78 = vmul.f32 %v62, %v76
    %v79 = vld [vmem:[%s1] sm:$0x1]
    %v81 = vlaneseq
    %v82 = vshrl.u32 %v81, 7
    %v83 = vsub.s32 0, %v82
    %v84 = vrot.slane %v79, %v83
    %v86 = vmul.f32 %v77, %v84
    %v87 = vmul.f32 %v78, %v84
    %v88 = vld [vmem:[%s2] sm:$0x1]
    %v90 = vlaneseq
    %v91 = vshrl.u32 %v90, 7
    %v92 = vsub.s32 0, %v91
    %v93 = vrot.slane %v88, %v92
    %v95 = vadd.f32 %v86, %v93
    %v96 = vadd.f32 %v87, %v93
    %v97 = vld [vmem:[#allocation5] sm:$0xff]
    %v98 = vld [vmem:[#allocation5 + $0x8] sm:$0xff]
    %v99 = vld [vmem:[#allocation5 + $0x10] sm:$0xff]
    %v100 = vld [vmem:[#allocation5 + $0x18] sm:$0xff]
    %v101 = vld [vmem:[%s4] sm:$0x1]
    %v103 = vlaneseq
    %v104 = vshrl.u32 %v103, 7
    %v105 = vsub.s32 0, %v104
    %v106 = vrot.slane %v101, %v105
    %v109 = vsel %vm51, %v95, 0
    %v112 = vsel %vm51, %v96, 0
    %114 = vmatprep.subr.mxu0 0.0
    %115 = vmatpush1.msra.mxu0 %v97
    %116 = vmatprep.subr.mxu0 0.0
    %117 = vmatpush1.msra.mxu0 %v98
    %118 = vmatprep.subr.mxu0 0.0
    %119 = vmatpush1.msra.mxu0 %v99
    %120 = vmatprep.subr.mxu0 0.0
    %121 = vmatpush1.msra.mxu0 %v100
    %122 = vmatprep.subr.mxu0 0.0
    %123 = vmatpush1.msra.mxu0 0.0
    %124 = vmatprep.subr.mxu0 0.0
    %125 = vmatpush1.msra.mxu0 0.0
    %126 = vmatprep.subr.mxu0 0.0
    %127 = vmatpush1.msra.mxu0 0.0
    %128 = vmatprep.subr.mxu0 0.0
    %129 = vmatpush1.msra.mxu0 0.0
    %130 = vmatprep.subr.mxu0 0.0
    %131 = vmatpush1.msra.mxu0 0.0
    %132 = vmatprep.subr.mxu0 0.0
    %133 = vmatpush1.msra.mxu0 0.0
    %134 = vmatprep.subr.mxu0 0.0
    %135 = vmatpush1.msra.mxu0 0.0
    %136 = vmatprep.subr.mxu0 0.0
    %137 = vmatpush1.msra.mxu0 0.0
    %138 = vmatprep.subr.mxu0 0.0
    %139 = vmatpush1.msra.mxu0 0.0
    %140 = vmatprep.subr.mxu0 0.0
    %141 = vmatpush1.msra.mxu0 0.0
    %142 = vmatprep.subr.mxu0 0.0
    %143 = vmatpush1.msra.mxu0 0.0
    %144 = vmatprep.subr.mxu0 0.0
    %145 = vmatpush1.msra.mxu0 0.0
    %146 = vmatprep.subr.mxu0 0.0
    %147 = vmatpush1.msra.mxu0 0.0
    %148 = vmatprep.subr.mxu0 0.0
    %149 = vmatpush1.msra.mxu0 0.0
    %150 = vmatprep.subr.mxu0 0.0
    %151 = vmatpush1.msra.mxu0 0.0
    %152 = vmatprep.subr.mxu0 0.0
    %153 = vmatpush1.msra.mxu0 0.0
    %154 = vmatprep.subr.mxu0 0.0
    %155 = vmatpush1.msra.mxu0 0.0
    %156 = vmatprep.subr.mxu0 0.0
    %157 = vmatpush1.msra.mxu0 0.0
    %158 = vmatprep.subr.mxu0 0.0
    %159 = vmatpush1.msra.mxu0 0.0
    %160 = vmatprep.subr.mxu0 0.0
    %161 = vmatpush1.msra.mxu0 0.0
    %162 = vmatprep.subr.mxu0 0.0
    %163 = vmatpush1.msra.mxu0 0.0
    %164 = vmatprep.subr.mxu0 0.0
    %165 = vmatpush1.msra.mxu0 0.0
    %166 = vmatprep.subr.mxu0 0.0
    %167 = vmatpush1.msra.mxu0 0.0
    %168 = vmatprep.subr.mxu0 0.0
    %169 = vmatpush1.msra.mxu0 0.0
    %170 = vmatprep.subr.mxu0 0.0
    %171 = vmatpush1.msra.mxu0 0.0
    %172 = vmatprep.subr.mxu0 0.0
    %173 = vmatpush1.msra.mxu0 0.0
    %174 = vmatprep.subr.mxu0 0.0
    %175 = vmatpush1.msra.mxu0 0.0
    %176 = vmatprep.subr.mxu0 0.0
    %177 = vmatpush1.msra.mxu0 0.0
    %178 = vmatprep.mubr.f32.mxu0 0.0
    %179 = vmatmul.mubr.f32.gmra.mrb[0].mxu0 %v109
    %v180 = vpop.f32.mrb[0].mxu0
    %v181 = vadd.f32 %v106, %v180
    %v182 = vpop.f32.mrb[0].mxu0
    %183 = vmatprep.mubr.f32.mxu0 0.0
    %184 = vmatmul.mubr.f32.gmra.mrb[0].mxu0 %v112
    %v185 = vpop.f32.mrb[0].mxu0
    %v186 = vadd.f32 %v106, %v185
    %v187 = vpop.f32.mrb[0].mxu0
    %188 = vdwg.mxu0
    %v189 = vadd.f32 %v49, %v181
    %v190 = vadd.f32 %v50, %v186
    %191 = vst.msk [vmem:[#allocation7] sm:$0xff] %vm51, %v189
    %192 = vst.msk [vmem:[#allocation7 + $0x8] sm:$0xff] %vm51, %v190
    // Predicated region
    $region30: #{tpu_custom_call.1} parent=1 // pred_check
      _
    $region31: #{tpu_custom_call.1} parent=1 // pred_check_branch
      %194 = sbr.rel (0) target = $region33
    $region32: #{tpu_custom_call.1} parent=1 // pred_region
      %s196 = ssub.s32 256, 256
      %197 = vsyncadd [#allocation4], %s196
      %s198 = sshll.u32 [#allocation7], 4
      %s199 = int_to_ptr.vmem [resolvable:$true] %s198
      %204 = dma.vmem_to_hbm [thread:$0]  %s199, 256, %s5, [#allocation4], 128, 128, 8
    $region33: #{tpu_custom_call.1} parent=1 // pred_fallthru
      _
    // Predicated region
    $region34: #{tpu_custom_call.1} parent=1 // pred_check
      _
    $region35: #{tpu_custom_call.1} parent=1 // pred_check_branch
      %206 = sbr.rel (0) target = $region37
    $region36: #{tpu_custom_call.1} parent=1 // pred_region
      %207 = dma.done [#allocation4], 256
    $region37: #{tpu_custom_call.1} parent=1 // pred_fallthru
      _
    %208 = vsyncpa [#allocation3], 1
    %209 = vsyncpa [#allocation6], 1
    %210 = vsyncpa [#allocation4], 1

</llo_original>
